<compile_context>
chip_gen: v7x
topology: tpu7x:2x2x1
jax: 0.10.0
libtpu: 0.0.40
codegen_flags: <defaults>
</compile_context>

<pallas_src>
import functools

import jax
import jax.numpy as jnp
from jax.experimental import pallas as pl
from jax.experimental.pallas import tpu as pltpu


def _round_up(x, m):
    return ((x + m - 1) // m) * m


def _num_tensorcores():
    """TensorCores per addressable device: 2 on megacore chips, else 1."""
    try:
        kind = jax.devices()[0].device_kind.lower()
    except Exception:
        return 1
    if any(tag in kind for tag in ("v4", "v5p", "v7", "tpu7")):
        return 2
    return 1


def _focal_loss_kernel(preds_ref, labels_ref, alpha_y_ref, out_ref, *,
                       gamma: float, scale: float, batch: int,
                       block_rows: int, tiles_per_core: int):
    """One [tb, C] batch tile; accumulates a scaled partial sum per core."""
    c = pl.program_id(0)
    i = pl.program_id(1)

    @pl.when(i == 0)
    def _init():
        out_ref[...] = jnp.zeros_like(out_ref)

    x = preds_ref[...].astype(jnp.float32)          # (tb, C) logits
    labels = labels_ref[...]                        # (tb, 1) int32
    alpha_y = alpha_y_ref[...]                      # (tb, 1) f32, pre-gathered

    # Stable log-softmax pieces without materializing softmax / log-softmax.
    m = jnp.max(x, axis=1, keepdims=True)
    shifted = x - m
    denom = jnp.sum(jnp.exp(shifted), axis=1, keepdims=True)

    # Select-then-reduce instead of a float one-hot multiply.
    cls = jax.lax.broadcasted_iota(jnp.int32, x.shape, 1)
    shifted_y = jnp.sum(jnp.where(cls == labels, shifted, 0.0),
                        axis=1, keepdims=True)

    logp_y = shifted_y - jnp.log(denom)             # log p[y]
    p_y = jnp.exp(logp_y)                           # p[y]
    base = jnp.maximum(1.0 - p_y, 0.0)              # clamp fp rounding

    if float(gamma) == int(gamma) and int(gamma) >= 0:
        pw = jnp.ones_like(base)
        for _ in range(int(gamma)):                 # integer gamma: VALU muls
            pw = pw * base
    else:
        pw = jnp.power(base, jnp.float32(gamma))    # gamma assumed >= 0

    loss = alpha_y * pw * (-logp_y)                 # (tb, 1)

    # Mask the ragged batch tail and fully-redundant (clamped) grid steps.
    # `batch` is a compile-time constant; OOB rows may contain NaN from
    # undefined tail data -- the select discards them before the reduction.
    row0 = (c * tiles_per_core + i) * block_rows
    rows = row0 + jax.lax.broadcasted_iota(jnp.int32, loss.shape, 0)
    loss = jnp.where(rows < batch, loss, 0.0)

    psum = jnp.sum(loss, keepdims=True) * jnp.float32(scale)   # (1, 1)
    out_ref[...] += psum.reshape(1, 1, 1)


def focal_loss_pallas(preds, labels, alpha_vec, *, gamma=2.0, size_average=True,
                      target_block_bytes=4 * 1024 * 1024, num_cores=None,
                      vmem_limit_bytes=40 * 1024 * 1024):
    """preds: [B, C], labels: [B] int, alpha_vec: [C] f32 -> scalar f32."""
    B, C = preds.shape
    labels = labels.astype(jnp.int32)

    # Tiny host-side per-sample gather; removes the in-kernel alpha reduction.
    alpha_y = jnp.asarray(alpha_vec, jnp.float32)[labels]       # [B]

    # Only a degenerate micro-batch (< 8 rows) is ever padded (negligible copy);
    # the general case streams preds unpadded and masks in-kernel.
    B_arr = B
    if B < 8:
        pad = 8 - B
        preds = jnp.pad(preds, ((0, pad), (0, 0)))
        labels = jnp.pad(labels, (0, pad))
        alpha_y = jnp.pad(alpha_y, (0, pad))
        B_arr = 8

    if num_cores is None:
        num_cores = _num_tensorcores()

    # Tile size from the *lane-padded* VMEM footprint (minor dim pads to 128).
    padded_row_bytes = _round_up(C, 128) * 4
    tb = max(8, (target_block_bytes // padded_row_bytes) // 8 * 8)
    tb = min(tb, max(8, (B_arr // 8) * 8))

    tiles_total = -(-B_arr // tb)
    num_cores = max(1, min(num_cores, tiles_total))
    tiles_per_core = -(-tiles_total // num_cores)
    last_tile = tiles_total - 1

    scale = (1.0 / B) if size_average else 1.0

    # Clamp the tile index so every DMA stays in bounds; redundant clamped
    # steps are zeroed by the in-kernel row mask (they re-read the last tile).
    def row_index_map(c, i):
        t = c * tiles_per_core + i
        return (jnp.minimum(t, last_tile), 0)

    kernel = functools.partial(
        _focal_loss_kernel, gamma=float(gamma), scale=float(scale),
        batch=B, block_rows=tb, tiles_per_core=tiles_per_core)

    partials = pl.pallas_call(
        kernel,
        out_shape=jax.ShapeDtypeStruct((num_cores, 1, 1), jnp.float32),
        grid=(num_cores, tiles_per_core),
        in_specs=[pl.BlockSpec((tb, C), row_index_map),
                  pl.BlockSpec((tb, 1), row_index_map),
                  pl.BlockSpec((tb, 1), row_index_map)],
        out_specs=pl.BlockSpec((1, 1, 1), lambda c, i: (c, 0, 0)),
        compiler_params=pltpu.CompilerParams(
            dimension_semantics=("parallel", "arbitrary"),
            vmem_limit_bytes=vmem_limit_bytes),
    )(preds, labels.reshape(B_arr, 1), alpha_y.reshape(B_arr, 1))

    return jnp.sum(partials)


def focal_loss_ref(preds, labels, alpha_vec, *, gamma=2.0, size_average=True):
    """Pure-JAX reference mirroring the PyTorch forward."""
    p = jax.nn.softmax(preds, axis=1)
    logp = jnp.log(p)
    p_y = jnp.take_along_axis(p, labels[:, None], axis=1)[:, 0]
    logp_y = jnp.take_along_axis(logp, labels[:, None], axis=1)[:, 0]
    a_y = jnp.asarray(alpha_vec)[labels]
    loss = a_y * (-((1.0 - p_y) ** gamma) * logp_y)
    return jnp.mean(loss) if size_average else jnp.sum(loss)


if __name__ == "__main__":
    key = jax.random.PRNGKey(0)
    k1, k2, k3, k4, k5, k6 = jax.random.split(key, 6)
    gamma = 2.0

    # --- Test 1: module defaults (num_classes=4, small batch) ---------------
    B, C = 8, 4
    preds = jax.random.normal(k1, (B, C), dtype=jnp.float32)
    labels = jax.random.randint(k2, (B,), 0, C, dtype=jnp.int32)
    alpha_vec = jnp.full((C,), 0.25, dtype=jnp.float32)
    out1 = jax.block_until_ready(
        focal_loss_pallas(preds, labels, alpha_vec, gamma=gamma,
                          size_average=True))
    ref1 = focal_loss_ref(preds, labels, alpha_vec, gamma=gamma,
                          size_average=True)
    assert jnp.allclose(out1, ref1, rtol=1e-5, atol=1e-5), (out1, ref1)

    # --- Test 2: many classes, size_average=False ---------------------------
    B2, C2 = 32, 256
    preds2 = jax.random.normal(k3, (B2, C2), dtype=jnp.float32)
    labels2 = jax.random.randint(k4, (B2,), 0, C2, dtype=jnp.int32)
    alpha2 = jnp.linspace(0.1, 1.0, C2, dtype=jnp.float32)
    out2 = jax.block_until_ready(
        focal_loss_pallas(preds2, labels2, alpha2, gamma=gamma,
                          size_average=False))
    ref2 = focal_loss_ref(preds2, labels2, alpha2, gamma=gamma,
                          size_average=False)
    assert jnp.allclose(out2, ref2, rtol=1e-5, atol=1e-4), (out2, ref2)

    # --- Test 3: ragged batch tail + forced 2-core grid (masking/clamping) --
    B3, C3 = 20, 4
    preds3 = jax.random.normal(k5, (B3, C3), dtype=jnp.float32)
    labels3 = jax.random.randint(k6, (B3,), 0, C3, dtype=jnp.int32)
    alpha3 = jnp.full((C3,), 0.25, dtype=jnp.float32)
    out3 = jax.block_until_ready(
        focal_loss_pallas(preds3, labels3, alpha3, gamma=gamma,
                          size_average=True, target_block_bytes=1,
                          num_cores=2))
    ref3 = focal_loss_ref(preds3, labels3, alpha3, gamma=gamma,
                          size_average=True)
    assert jnp.allclose(out3, ref3, rtol=1e-5, atol=1e-5), (out3, ref3)

    print("KERNEL_OK")
</pallas_src>

<mosaic_0001>
module attributes {stable_mosaic.version = 11 : i64} {
  func.func @_focal_loss_kernel(%arg0: i32, %arg1: i32, %arg2: memref<8x4xf32, #tpu.memory_space<vmem>>, %arg3: memref<8x1xi32, #tpu.memory_space<vmem>>, %arg4: memref<8x1xf32, #tpu.memory_space<vmem>>, %arg5: memref<1x1x1xf32, #tpu.memory_space<vmem>>) attributes {dimension_semantics = [#tpu.dimension_semantics<parallel>, #tpu.dimension_semantics<arbitrary>], iteration_bounds = array<i64: 1, 1>, scalar_prefetch = 0 : i64, scratch_operands = 0 : i64, tpu.core_type = #tpu.core_type<tc>, window_params = [{transform_indices = @transform_0, window_bounds = array<i64: 8, 4>}, {transform_indices = @transform_1, window_bounds = array<i64: 8, 1>}, {transform_indices = @transform_2, window_bounds = array<i64: 8, 1>}, {transform_indices = @transform_3, window_bounds = array<i64: 1, 1, 1>}]} {
    %c0_i32 = arith.constant 0 : i32
    %0 = arith.cmpi eq, %arg1, %c0_i32 : i32
    %1 = arith.extui %0 : i1 to i32
    %c0_i32_0 = arith.constant 0 : i32
    %2 = arith.cmpi ne, %1, %c0_i32_0 : i32
    scf.if %2 {
      %cst_23 = arith.constant 0.000000e+00 : f32
      %55 = vector.broadcast %cst_23 : f32 to vector<1x1x1xf32>
      %c0_24 = arith.constant 0 : index
      %c0_25 = arith.constant 0 : index
      %c0_26 = arith.constant 0 : index
      %56 = vector.load %arg5[%c0_24, %c0_25, %c0_26] : memref<1x1x1xf32, #tpu.memory_space<vmem>>, vector<1x1x1xf32>
      tpu.vector_store %arg5[%c0_24, %c0_25, %c0_26], %55 {strides = array<i32>} : memref<1x1x1xf32, #tpu.memory_space<vmem>>, vector<1x1x1xf32>,
    } else {
    }
    %c0 = arith.constant 0 : index
    %c0_1 = arith.constant 0 : index
    %3 = vector.load %arg2[%c0, %c0_1] : memref<8x4xf32, #tpu.memory_space<vmem>>, vector<8x4xf32>
    %c0_2 = arith.constant 0 : index
    %c0_3 = arith.constant 0 : index
    %4 = vector.load %arg3[%c0_2, %c0_3] : memref<8x1xi32, #tpu.memory_space<vmem>>, vector<8x1xi32>
    %c0_4 = arith.constant 0 : index
    %c0_5 = arith.constant 0 : index
    %5 = vector.load %arg4[%c0_4, %c0_5] : memref<8x1xf32, #tpu.memory_space<vmem>>, vector<8x1xf32>
    %cst = arith.constant dense<0xFF800000> : vector<8xf32>
    %6 = vector.multi_reduction <maximumf>, %3, %cst [1] : vector<8x4xf32> to vector<8xf32>
    %7 = vector.shape_cast %6 : vector<8xf32> to vector<8x1xf32>
    %8 = vector.broadcast %7 : vector<8x1xf32> to vector<8x4xf32>
    %9 = arith.subf %3, %8 : vector<8x4xf32>
    %10 = math.exp %9 : vector<8x4xf32>
    %cst_6 = arith.constant dense<0.000000e+00> : vector<8xf32>
    %11 = vector.multi_reduction <add>, %10, %cst_6 [1] : vector<8x4xf32> to vector<8xf32>
    %12 = vector.shape_cast %11 : vector<8xf32> to vector<8x1xf32>
    %13 = tpu.iota {dimensions = array<i32: 1>} : vector<8x4xi32>
    %14 = vector.broadcast %4 : vector<8x1xi32> to vector<8x4xi32>
    %15 = arith.cmpi eq, %13, %14 : vector<8x4xi32>
    %cst_7 = arith.constant 0.000000e+00 : f32
    %16 = vector.broadcast %cst_7 : f32 to vector<8x4xf32>
    %17 = arith.select %15, %9, %16 : vector<8x4xi1>, vector<8x4xf32>
    %cst_8 = arith.constant dense<0.000000e+00> : vector<8xf32>
    %18 = vector.multi_reduction <add>, %17, %cst_8 [1] : vector<8x4xf32> to vector<8xf32>
    %19 = vector.shape_cast %18 : vector<8xf32> to vector<8x1xf32>
    %20 = math.log %12 : vector<8x1xf32>
    %21 = arith.subf %19, %20 : vector<8x1xf32>
    %22 = math.exp %21 : vector<8x1xf32>
    %cst_9 = arith.constant 1.000000e+00 : f32
    %23 = vector.broadcast %cst_9 : f32 to vector<8x1xf32>
    %24 = arith.subf %23, %22 : vector<8x1xf32>
    %cst_10 = arith.constant 0.000000e+00 : f32
    %25 = vector.broadcast %cst_10 : f32 to vector<8x1xf32>
    %26 = arith.maximumf %24, %25 : vector<8x1xf32>
    %cst_11 = arith.constant 1.000000e+00 : f32
    %27 = vector.broadcast %cst_11 : f32 to vector<8x1xf32>
    %28 = arith.mulf %27, %26 : vector<8x1xf32>
    %29 = arith.mulf %28, %26 : vector<8x1xf32>
    %30 = arith.mulf %5, %29 : vector<8x1xf32>
    %cst_12 = arith.constant 0.000000e+00 : f32
    %31 = vector.broadcast %cst_12 : f32 to vector<8x1xf32>
    %32 = arith.subf %31, %21 : vector<8x1xf32>
    %33 = arith.mulf %30, %32 : vector<8x1xf32>
    %c1_i32 = arith.constant 1 : i32
    %34 = arith.muli %arg0, %c1_i32 : i32
    %35 = arith.addi %34, %arg1 : i32
    %c8_i32 = arith.constant 8 : i32
    %36 = arith.muli %35, %c8_i32 : i32
    %37 = tpu.iota {dimensions = array<i32: 0>} : vector<8x1xi32>
    %38 = vector.broadcast %36 : i32 to vector<8x1xi32>
    %39 = arith.addi %38, %37 : vector<8x1xi32>
    %c8_i32_13 = arith.constant 8 : i32
    %40 = vector.broadcast %c8_i32_13 : i32 to vector<8x1xi32>
    %41 = arith.cmpi slt, %39, %40 : vector<8x1xi32>
    %cst_14 = arith.constant 0.000000e+00 : f32
    %42 = vector.broadcast %cst_14 : f32 to vector<8x1xf32>
    %43 = arith.select %41, %33, %42 : vector<8x1xi1>, vector<8x1xf32>
    %44 = vector.shape_cast %43 : vector<8x1xf32> to vector<1x8x1xf32>
    %cst_15 = arith.constant dense<0.000000e+00> : vector<1xf32>
    %45 = vector.multi_reduction <add>, %44, %cst_15 [1, 2] : vector<1x8x1xf32> to vector<1xf32>
    %46 = vector.shape_cast %45 : vector<1xf32> to vector<1x1x1xf32>
    %47 = vector.extract %46[0, 0, 0] : f32 from vector<1x1x1xf32>
    %48 = vector.broadcast %47 : f32 to vector<1x1xf32>
    %cst_16 = arith.constant 1.250000e-01 : f32
    %49 = vector.broadcast %cst_16 : f32 to vector<1x1xf32>
    %50 = arith.mulf %48, %49 : vector<1x1xf32>
    %c0_17 = arith.constant 0 : index
    %c0_18 = arith.constant 0 : index
    %c0_19 = arith.constant 0 : index
    %51 = vector.load %arg5[%c0_17, %c0_18, %c0_19] : memref<1x1x1xf32, #tpu.memory_space<vmem>>, vector<1x1x1xf32>
    %52 = vector.shape_cast %50 : vector<1x1xf32> to vector<1x1x1xf32>
    %53 = arith.addf %51, %52 : vector<1x1x1xf32>
    %c0_20 = arith.constant 0 : index
    %c0_21 = arith.constant 0 : index
    %c0_22 = arith.constant 0 : index
    %54 = vector.load %arg5[%c0_20, %c0_21, %c0_22] : memref<1x1x1xf32, #tpu.memory_space<vmem>>, vector<1x1x1xf32>
    tpu.vector_store %arg5[%c0_20, %c0_21, %c0_22], %53 {strides = array<i32>} : memref<1x1x1xf32, #tpu.memory_space<vmem>>, vector<1x1x1xf32>,
    return
  }
  func.func @transform_0(%arg0: i32, %arg1: i32) -> (i32, i32) {
    %c1_i32 = arith.constant 1 : i32
    %0 = arith.muli %arg0, %c1_i32 : i32
    %1 = arith.addi %0, %arg1 : i32
    %c0_i32 = arith.constant 0 : i32
    %2 = arith.minsi %1, %c0_i32 : i32
    %c0_i32_0 = arith.constant 0 : i32
    %c0_i32_1 = arith.constant 0 : i32
    return %2, %c0_i32_0 : i32, i32
  }
  func.func @transform_1(%arg0: i32, %arg1: i32) -> (i32, i32) {
    %c1_i32 = arith.constant 1 : i32
    %0 = arith.muli %arg0, %c1_i32 : i32
    %1 = arith.addi %0, %arg1 : i32
    %c0_i32 = arith.constant 0 : i32
    %2 = arith.minsi %1, %c0_i32 : i32
    %c0_i32_0 = arith.constant 0 : i32
    %c0_i32_1 = arith.constant 0 : i32
    return %2, %c0_i32_0 : i32, i32
  }
  func.func @transform_2(%arg0: i32, %arg1: i32) -> (i32, i32) {
    %c1_i32 = arith.constant 1 : i32
    %0 = arith.muli %arg0, %c1_i32 : i32
    %1 = arith.addi %0, %arg1 : i32
    %c0_i32 = arith.constant 0 : i32
    %2 = arith.minsi %1, %c0_i32 : i32
    %c0_i32_0 = arith.constant 0 : i32
    %c0_i32_1 = arith.constant 0 : i32
    return %2, %c0_i32_0 : i32, i32
  }
  func.func @transform_3(%arg0: i32, %arg1: i32) -> (i32, i32, i32) {
    %c0_i32 = arith.constant 0 : i32
    %c0_i32_0 = arith.constant 0 : i32
    %c0_i32_1 = arith.constant 0 : i32
    return %arg0, %c0_i32, %c0_i32_0 : i32, i32, i32
  }
}

</mosaic_0001>

<llo_original>
// kernel: tpu_custom_call.1
$region0: #{tpu_custom_call.1}
  #allocation0 [shape = 'u32[]', space=smem, size = 0x4, offset = 0x4, fixed_abs, tag = 'smem constant byte address 0x4 - core index']
  #allocation1 [shape = 'u32[144,128]{1,0:T(1,128)}', space=vmem, size = 0x12000, scoped, tag = 'internal scratch']
  %s0 = inlined_call_operand.vmem [shape: f32[8,4], index: 0, kind: input, shape index: {}]
  %s1 = inlined_call_operand.vmem [shape: s32[8,1], index: 1, kind: input, shape index: {}]
  %s2 = inlined_call_operand.vmem [shape: f32[8,1], index: 2, kind: input, shape index: {}]
  %s3 = inlined_call_operand.hbm [shape: f32[1,1,1], index: 3, kind: output, shape index: {}]
  %s4 = sld [smem:[#allocation0]]
  $region26: #{tpu_custom_call.1} parent=0
    _
  %s6 = ssub.s32 1, %s4
  %s7 = scalar_select 0, %s6, %s4
  $region1: #{tpu_custom_call.1} parent=0
    #allocation2 [shape = 'u8[512]{0}', space=vmem, size = 0x400, scoped, tag = 'output window, operand 0, single buffered']
    #allocation3 [shape = 's32[1]{0}', space=sflag, size = 0x4, scoped, tag = 'scoped memory for tpu_custom_call.1']
    %8 = vsyncpa [#allocation3], 0
    // Predicated region
    $region2: #{tpu_custom_call.1} parent=1 // pred_check
      _
    $region3: #{tpu_custom_call.1} parent=1 // pred_check_branch
      %10 = sbr.rel (0) target = $region5
    $region4: #{tpu_custom_call.1} parent=1 // pred_region
      %s11 = sadd.s32 0, 0
      %p12 = scmp.lt.s32.totalorder %s11, 0
      %s13 = scalar_select %p12, %s11, 0
      %p14 = scmp.lt.s32.totalorder %s13, 0
      %s15 = scalar_select %p14, %s13, 0
      %s16 = smul.addr %s15, 8
      %s17 = scalar_lea.vmem %s0, %s16
      %s18 = sadd.s32 0, 0
      %p19 = scmp.lt.s32.totalorder %s18, 0
      %s20 = scalar_select %p19, %s18, 0
    $region5: #{tpu_custom_call.1} parent=1 // pred_fallthru
      _
    // Predicated region
    $region6: #{tpu_custom_call.1} parent=1 // pred_check
      _
    $region7: #{tpu_custom_call.1} parent=1 // pred_check_branch
      %22 = sbr.rel (0) target = $region9
    $region8: #{tpu_custom_call.1} parent=1 // pred_region
      %s23 = sadd.s32 0, 0
      %p24 = scmp.lt.s32.totalorder %s23, 0
      %s25 = scalar_select %p24, %s23, 0
      %p26 = scmp.lt.s32.totalorder %s25, 0
      %s27 = scalar_select %p26, %s25, 0
      %s28 = smul.addr %s27, 8
      %s29 = scalar_lea.vmem %s1, %s28
      %s30 = sadd.s32 0, 0
      %p31 = scmp.lt.s32.totalorder %s30, 0
      %s32 = scalar_select %p31, %s30, 0
    $region9: #{tpu_custom_call.1} parent=1 // pred_fallthru
      _
    // Predicated region
    $region10: #{tpu_custom_call.1} parent=1 // pred_check
      _
    $region11: #{tpu_custom_call.1} parent=1 // pred_check_branch
      %34 = sbr.rel (0) target = $region13
    $region12: #{tpu_custom_call.1} parent=1 // pred_region
      %s35 = sadd.s32 0, 0
      %p36 = scmp.lt.s32.totalorder %s35, 0
      %s37 = scalar_select %p36, %s35, 0
      %p38 = scmp.lt.s32.totalorder %s37, 0
      %s39 = scalar_select %p38, %s37, 0
      %s40 = smul.addr %s39, 8
      %s41 = scalar_lea.vmem %s2, %s40
      %s42 = sadd.s32 0, 0
      %p43 = scmp.lt.s32.totalorder %s42, 0
      %s44 = scalar_select %p43, %s42, 0
    $region13: #{tpu_custom_call.1} parent=1 // pred_fallthru
      _
    %s45 = sadd.s32 0, 0
    %p46 = scmp.lt.s32.totalorder %s45, 0
    %s47 = scalar_select %p46, %s45, 0
    %p48 = scmp.lt.s32.totalorder %s47, 0
    %s49 = scalar_select %p48, %s47, 0
    %s50 = smul.addr %s49, 8
    %s51 = scalar_lea.vmem %s0, %s50
    %s52 = sadd.s32 0, 0
    %p53 = scmp.lt.s32.totalorder %s52, 0
    %s54 = scalar_select %p53, %s52, 0
    %p55 = scmp.lt.s32.totalorder %s54, 0
    %s56 = scalar_select %p55, %s54, 0
    %s57 = smul.addr %s56, 8
    %s58 = scalar_lea.vmem %s1, %s57
    %s59 = sadd.s32 0, 0
    %p60 = scmp.lt.s32.totalorder %s59, 0
    %s61 = scalar_select %p60, %s59, 0
    %p62 = scmp.lt.s32.totalorder %s61, 0
    %s63 = scalar_select %p62, %s61, 0
    %s64 = smul.addr %s63, 8
    %s65 = scalar_lea.vmem %s2, %s64
    %s66 = sadd.s32 0, 0
    %p67 = scmp.lt.s32.totalorder %s66, 0
    %s68 = scalar_select %p67, %s66, 0
    %p69 = scmp.lt.s32.totalorder %s68, 0
    %s70 = scalar_select %p69, %s68, 0
    %s71 = smul.addr %s70, 8
    %s72 = scalar_lea.vmem %s0, %s71
    %s73 = sadd.s32 0, 0
    %p74 = scmp.lt.s32.totalorder %s73, 0
    %s75 = scalar_select %p74, %s73, 0
    %s76 = sadd.s32 0, 0
    %p77 = scmp.lt.s32.totalorder %s76, 0
    %s78 = scalar_select %p77, %s76, 0
    %p79 = scmp.lt.s32.totalorder %s78, 0
    %s80 = scalar_select %p79, %s78, 0
    %s81 = smul.addr %s80, 8
    %s82 = scalar_lea.vmem %s1, %s81
    %s83 = sadd.s32 0, 0
    %p84 = scmp.lt.s32.totalorder %s83, 0
    %s85 = scalar_select %p84, %s83, 0
    %s86 = sadd.s32 0, 0
    %p87 = scmp.lt.s32.totalorder %s86, 0
    %s88 = scalar_select %p87, %s86, 0
    %p89 = scmp.lt.s32.totalorder %s88, 0
    %s90 = scalar_select %p89, %s88, 0
    %s91 = smul.addr %s90, 8
    %s92 = scalar_lea.vmem %s2, %s91
    %s93 = sadd.s32 0, 0
    %p94 = scmp.lt.s32.totalorder %s93, 0
    %s95 = scalar_select %p94, %s93, 0
    %p96 = scmp.eq.s32.totalorder 0, 0
    // Predicated region
    $region14: #{tpu_custom_call.1} parent=1 // pred_check
      %p97 = pneg %p96
    $region15: #{tpu_custom_call.1} parent=1 // pred_check_branch
      %99 = sbr.rel (%p97) target = $region17
    $region16: #{tpu_custom_call.1} parent=1 // pred_region
      %vm100 = vcmask 0
      %101 = vst.msk [vmem:[#allocation2] sm:$0x1] %vm100, 0.0
    $region17: #{tpu_custom_call.1} parent=1 // pred_fallthru
      _
    %v102 = vld [vmem:[%s72] sm:$0xff]
    %v103 = vld [vmem:[%s82] sm:$0xff]
    %v104 = vld [vmem:[%s92] sm:$0xff]
    %vm105 = vcmask 31744
    %v106 = vsel %vm105, %v102, -inf
    %107 = vmax.xlane.f32.xlu0 %v106
    %v108 = vpop.xlane.xlu0 %107
    %v109 = vsub.f32 %v102, %v108
    %v110 = vmul.f32 %v109, 1.442695
    %v111 = vpow.pop %v110
    %v112 = vsel %vm105, %v111, 0.0
    %113 = vadd.xlane.f32.xlu0 %v112
    %v114 = vpop.xlane.xlu0 %113
    %v115 = vlaneseq
    %v116 = vand.u32 %v115, 127
    %117 = vset.pattern.permute.xlu0 0
    %118 = vperm.xlu0 %117, %v103
    %v119 = vpop.permute.xlu0 %118
    %vm120 = vcmp.eq.s32.totalorder %v116, %v119
    %v121 = vsel %vm120, %v109, 0.0
    %v122 = vsel %vm105, %v121, 0.0
    %123 = vadd.xlane.f32.xlu0 %v122
    %v124 = vpop.xlane.xlu0 %123
    %v125 = vlog2.pop %v114
    %v126 = vmul.f32 %v125, 0.6931472
    %v127 = vsub.f32 %v124, %v126
    %v128 = vmul.f32 %v127, 1.442695
    %v129 = vpow.pop %v128
    %v130 = vsub.f32 1.0, %v129
    %v131 = vmax.f32 %v130, 0.0
    %v132 = vmul.f32 %v131, %v131
    %v133 = vmul.f32 %v104, %v132
    %v134 = vsub.f32 0.0, %v127
    %v135 = vmul.f32 %v133, %v134
    %s136 = sadd.s32 0, 0
    %s137 = smul.u32 %s136, 8
    %v138 = vlaneseq
    %v139 = vshrl.u32 %v138, 7
    %v140 = vstv %s137
    %v141 = vadd.s32 %v140, %v139
    %vm142 = vcmp.lt.s32.totalorder %v141, 8
    %v143 = vsel %vm142, %v135, 0.0
    %vm144 = vcmask 7168
    %v145 = vsel %vm144, %v143, 0.0
    %146 = vadd.xlane.f32.xlu0 %v145
    %v147 = vpop.xlane.xlu0 %146
    %v148 = vrot.slane %v147, 4
    %v149 = vadd.f32 %v147, %v148
    %v150 = vrot.slane %v149, 2
    %v151 = vadd.f32 %v149, %v150
    %v152 = vrot.slane %v151, 1
    %v153 = vadd.f32 %v151, %v152
    %s154 = vtos %v153
    %v155 = vstv %s154
    %v156 = vmul.f32 %v155, 0.125
    %v157 = vld [vmem:[#allocation2] sm:$0x1]
    %v158 = vadd.f32 %v157, %v156
    %vm159 = vcmask 0
    %160 = vst.msk [vmem:[#allocation2] sm:$0x1] %vm159, %v158
    // Predicated region
    $region18: #{tpu_custom_call.1} parent=1 // pred_check
      _
    $region19: #{tpu_custom_call.1} parent=1 // pred_check_branch
      %162 = sbr.rel (0) target = $region21
    $region20: #{tpu_custom_call.1} parent=1 // pred_region
      %s164 = ssub.s32 16, 16
      %165 = vsyncadd [#allocation3], %s164
      %s167 = sshll.u32 [#allocation2], 4
      %s168 = int_to_ptr.vmem [resolvable:$true] %s167
      %170 = dma.vmem_to_hbm [thread:$0]  %s168, 16, %s3, [#allocation3]
    $region21: #{tpu_custom_call.1} parent=1 // pred_fallthru
      _
    // Predicated region
    $region22: #{tpu_custom_call.1} parent=1 // pred_check
      _
    $region23: #{tpu_custom_call.1} parent=1 // pred_check_branch
      %172 = sbr.rel (0) target = $region25
    $region24: #{tpu_custom_call.1} parent=1 // pred_region
      %173 = dma.done [#allocation3], 16
    $region25: #{tpu_custom_call.1} parent=1 // pred_fallthru
      _
    %174 = vsyncpa [#allocation3], 1

</llo_original>
